<compile_context>
chip_gen: v5e
topology: v5e:2x2
jax: 0.10.0
libtpu: 0.0.40
codegen_flags: <defaults>
</compile_context>

<pallas_src>
import jax
import jax.numpy as jnp
from jax.experimental import pallas as pl
from jax.experimental.pallas import tpu as pltpu


def _make_focal_loss_kernel(gamma, alpha, row_block, width, n_valid_rows,
                            need_mask, approx_reciprocal):
    """Kernel body with all hyper-parameters baked in as static constants."""

    def kernel(pred_ref, label_ref, out_ref):
        x = pred_ref[...].astype(jnp.float32)
        y = label_ref[...].astype(jnp.float32)

        # Shared transcendental: e = exp(-|x|) feeds both the stable BCE
        # softplus term and the sigmoid (one EUP exp instead of two).
        e = jnp.exp(-jnp.abs(x))

        # Numerically-stable BCE with logits (== F.binary_cross_entropy_with_logits).
        bce = jnp.maximum(x, 0.0) - x * y + jnp.log1p(e)

        # sigmoid(x) from the shared exp: sigmoid(|x|) = 1/(1+e); reflect for x<0.
        one_plus_e = 1.0 + e
        if approx_reciprocal:
            inv = pl.reciprocal(one_plus_e, approx=True)   # EUP vrcp, off VPU path
        else:
            inv = 1.0 / one_plus_e
        p = jnp.where(x >= 0.0, inv, 1.0 - inv)

        # Focal modulation.
        p_t = y * p + (1.0 - y) * (1.0 - p)
        z = 1.0 - p_t
        if gamma == 1.5:
            mod = z * jnp.sqrt(z)          # z**1.5 without pow's log+exp pair
        elif gamma == 2.0:
            mod = z * z
        elif gamma == 1.0:
            mod = z
        elif gamma == 0.0:
            mod = jnp.ones_like(z)
        else:
            mod = jnp.power(z, jnp.float32(gamma))
        loss = bce * mod

        if alpha > 0:
            loss = loss * (y * alpha + (1.0 - y) * (1.0 - alpha))

        if need_mask:
            # Cheap (rb, 1) row iota vs. scalar bound; broadcast inside the
            # select.  Discards the unspecified rows of the partial last block
            # (no jnp.pad in the wrapper).  Select does not propagate NaN/Inf
            # from the unselected garbage lanes.
            i = pl.program_id(0)
            row = jax.lax.broadcasted_iota(jnp.int32, (row_block, 1), 0)
            valid = (i * row_block + row) < n_valid_rows
            loss = jnp.where(valid, loss, 0.0)

        # Fold the row_block rows into one (8, W) slab: the reshape is
        # tile-aligned (W % 128 == 0 on the lane-dense path) and the axis-0
        # sum is plain vreg adds on the VPU.  The final cross-lane/sublane
        # reduce happens once, outside the kernel.
        out_ref[...] = loss.reshape(row_block // 8, 8, width).sum(axis=0)

    return kernel


def _sublane_multiple(dtype):
    """Second-minor block-dim multiple for packed dtypes (f32:8, bf16:16, i8:32)."""
    return {4: 8, 2: 16, 1: 32}.get(jnp.dtype(dtype).itemsize, 8)


def focal_loss(pred, label, gamma=1.5, alpha=0.25, *,
               bytes_per_step=12 * 1024 * 1024, approx_reciprocal=True):
    """Pallas TPU implementation of FocalLoss.forward for 2-D (N, C) inputs."""
    assert pred.shape == label.shape and pred.ndim == 2
    N, C = pred.shape
    LANE = 128

    # ---- Lane-dense 2-D view -------------------------------------------------
    # The loss is elementwise and the result is total_sum / C, so any 2-D view
    # of the same contiguous data is valid.  If C isn't a multiple of 128 but
    # N*C factors into a 128-multiple width, use the flattened view to avoid
    # wasted lanes / masked stores (e.g. YOLO C=80).
    if C % LANE == 0:
        vp, vl, R, W = pred, label, N, C
    else:
        total = N * C
        W = next((w for w in (1024, 512, 256, 128) if total % w == 0), 0)
        if W:
            R = total // W
            vp = pred.reshape(R, W)      # free reshape of a contiguous array
            vl = label.reshape(R, W)
        else:
            vp, vl, R, W = pred, label, N, C   # lane-padded fallback, still correct

    # ---- Row-block sizing ----------------------------------------------------
    align = max(_sublane_multiple(vp.dtype), _sublane_multiple(vl.dtype))
    row_bytes = W * (jnp.dtype(vp.dtype).itemsize + jnp.dtype(vl.dtype).itemsize)
    rb = max(align, (int(bytes_per_step) // row_bytes) // align * align)

    rows_aligned = pl.cdiv(R, align) * align
    rb = min(rb, rows_aligned)
    # Megacore: if everything would land in a single block, split in two so a
    # v7x chip (2 TensorCores) can shard the "parallel" grid axis.
    if rb >= rows_aligned and rows_aligned >= 2 * align:
        rb = ((rows_aligned // 2) + align - 1) // align * align
    rb = max(align, (rb // align) * align)

    n_blocks = pl.cdiv(R, rb)
    need_mask = n_blocks * rb != R      # partial last block -> mask garbage rows

    kernel = _make_focal_loss_kernel(float(gamma), float(alpha), rb, W, R,
                                     need_mask, bool(approx_reciprocal))

    # VMEM limit matched to 2 inputs x 2 pipeline buffers x block (+ outputs,
    # + margin).  Stays well inside v7x's 64 MiB/TC; raises v5e's 16 MiB default.
    vmem_need = 2 * rb * row_bytes + 2 * (8 * W * 4) + (2 << 20)
    vmem_limit = int(min(max(vmem_need, 16 << 20), 48 << 20))

    partials = pl.pallas_call(
        kernel,
        out_shape=jax.ShapeDtypeStruct((n_blocks * 8, W), jnp.float32),
        grid_spec=pltpu.PrefetchScalarGridSpec(
            num_scalar_prefetch=0,
            grid=(n_blocks,),
            in_specs=[
                pl.BlockSpec((rb, W), lambda i: (i, 0)),
                pl.BlockSpec((rb, W), lambda i: (i, 0)),
            ],
            out_specs=pl.BlockSpec((8, W), lambda i: (i, 0)),
        ),
        compiler_params=pltpu.CompilerParams(
            dimension_semantics=("parallel",),   # independent blocks -> megacore OK
            vmem_limit_bytes=vmem_limit,
        ),
    )(vp, vl)

    # loss.mean(axis=1).sum() == total_sum / C for a 2-D (N, C) input.
    return jnp.sum(partials) / jnp.float32(C)


def focal_loss_ref(pred, label, gamma=1.5, alpha=0.25):
    """Pure-JAX reference mirroring the PyTorch module."""
    x = pred.astype(jnp.float32)
    y = label.astype(jnp.float32)
    bce = jnp.maximum(x, 0.0) - x * y + jnp.log1p(jnp.exp(-jnp.abs(x)))
    p = jax.nn.sigmoid(x)
    p_t = y * p + (1.0 - y) * (1.0 - p)
    loss = bce * (1.0 - p_t) ** gamma
    if alpha > 0:
        loss = loss * (y * alpha + (1.0 - y) * (1.0 - alpha))
    return loss.mean(axis=1).sum()


if __name__ == "__main__":
    key = jax.random.PRNGKey(0)
    ks = jax.random.split(key, 8)

    def check(pred, label):
        ref = focal_loss_ref(pred, label)
        # Exact-reciprocal path: bit-tight validation of the math.
        out = jax.block_until_ready(focal_loss(pred, label,
                                               approx_reciprocal=False))
        assert jnp.allclose(out, ref, rtol=1e-5, atol=1e-5), (out, ref)
        # Default approx EUP reciprocal: looser tolerance (hardware vrcp).
        out_a = jax.block_until_ready(focal_loss(pred, label))
        assert jnp.allclose(out_a, ref, rtol=2e-2, atol=2e-2), (out_a, ref)

    # Case 1: lane-aligned (N=16, C=128) -> split into 2 blocks (megacore path).
    pred1 = jax.random.normal(ks[0], (16, 128), jnp.float32) * 2.0
    lab1 = jax.random.bernoulli(ks[1], 0.3, (16, 128)).astype(jnp.float32)
    check(pred1, lab1)

    # Case 2: ragged N=20 -> partial last block, no jnp.pad, in-kernel row mask.
    pred2 = jax.random.normal(ks[2], (20, 128), jnp.float32) * 2.0
    lab2 = jax.random.bernoulli(ks[3], 0.3, (20, 128)).astype(jnp.float32)
    check(pred2, lab2)

    # Case 3: YOLO-style C=80 -> lane-dense flattened (R, 256) view + mask.
    pred3 = jax.random.normal(ks[4], (16, 80), jnp.float32) * 2.0
    lab3 = jax.random.bernoulli(ks[5], 0.3, (16, 80)).astype(jnp.float32)
    check(pred3, lab3)

    # Case 4: bf16 logits (halved HBM traffic), f32 labels, 16-row alignment.
    pred4 = (jax.random.normal(ks[6], (64, 128), jnp.float32) * 2.0).astype(jnp.bfloat16)
    lab4 = jax.random.bernoulli(ks[7], 0.3, (64, 128)).astype(jnp.float32)
    check(pred4, lab4)

    print("KERNEL_OK")
</pallas_src>

<mosaic_0001>
module attributes {stable_mosaic.version = 11 : i64} {
  func.func @kernel(%arg0: i32, %arg1: memref<8x128xf32, #tpu.memory_space<vmem>>, %arg2: memref<8x128xf32, #tpu.memory_space<vmem>>, %arg3: memref<8x128xf32, #tpu.memory_space<vmem>>) attributes {dimension_semantics = [#tpu.dimension_semantics<parallel>], iteration_bounds = array<i64: 2>, scalar_prefetch = 0 : i64, scratch_operands = 0 : i64, tpu.core_type = #tpu.core_type<tc>, window_params = [{transform_indices = @transform_0, window_bounds = array<i64: 8, 128>}, {transform_indices = @transform_1, window_bounds = array<i64: 8, 128>}, {transform_indices = @transform_2, window_bounds = array<i64: 8, 128>}]} {
    %c0 = arith.constant 0 : index
    %c0_0 = arith.constant 0 : index
    %0 = vector.load %arg1[%c0, %c0_0] : memref<8x128xf32, #tpu.memory_space<vmem>>, vector<8x128xf32>
    %c0_1 = arith.constant 0 : index
    %c0_2 = arith.constant 0 : index
    %1 = vector.load %arg2[%c0_1, %c0_2] : memref<8x128xf32, #tpu.memory_space<vmem>>, vector<8x128xf32>
    %2 = math.absf %0 : vector<8x128xf32>
    %cst = arith.constant 0.000000e+00 : f32
    %3 = vector.broadcast %cst : f32 to vector<8x128xf32>
    %4 = arith.subf %3, %2 : vector<8x128xf32>
    %5 = math.exp %4 : vector<8x128xf32>
    %cst_3 = arith.constant 0.000000e+00 : f32
    %6 = vector.broadcast %cst_3 : f32 to vector<8x128xf32>
    %7 = arith.maximumf %0, %6 : vector<8x128xf32>
    %8 = arith.mulf %0, %1 : vector<8x128xf32>
    %9 = arith.subf %7, %8 : vector<8x128xf32>
    %10 = math.log1p %5 : vector<8x128xf32>
    %11 = arith.addf %9, %10 : vector<8x128xf32>
    %cst_4 = arith.constant 1.000000e+00 : f32
    %12 = vector.broadcast %cst_4 : f32 to vector<8x128xf32>
    %13 = arith.addf %12, %5 : vector<8x128xf32>
    %cst_5 = arith.constant 1.000000e+00 : f32
    %14 = vector.broadcast %cst_5 : f32 to vector<8x128xf32>
    %15 = arith.divf %14, %13 : vector<8x128xf32>
    %cst_6 = arith.constant 0.000000e+00 : f32
    %16 = vector.broadcast %cst_6 : f32 to vector<8x128xf32>
    %17 = arith.cmpf oge, %0, %16 : vector<8x128xf32>
    %cst_7 = arith.constant 1.000000e+00 : f32
    %18 = vector.broadcast %cst_7 : f32 to vector<8x128xf32>
    %19 = arith.subf %18, %15 : vector<8x128xf32>
    %20 = arith.select %17, %15, %19 : vector<8x128xi1>, vector<8x128xf32>
    %21 = arith.mulf %1, %20 : vector<8x128xf32>
    %cst_8 = arith.constant 1.000000e+00 : f32
    %22 = vector.broadcast %cst_8 : f32 to vector<8x128xf32>
    %23 = arith.subf %22, %1 : vector<8x128xf32>
    %cst_9 = arith.constant 1.000000e+00 : f32
    %24 = vector.broadcast %cst_9 : f32 to vector<8x128xf32>
    %25 = arith.subf %24, %20 : vector<8x128xf32>
    %26 = arith.mulf %23, %25 : vector<8x128xf32>
    %27 = arith.addf %21, %26 : vector<8x128xf32>
    %cst_10 = arith.constant 1.000000e+00 : f32
    %28 = vector.broadcast %cst_10 : f32 to vector<8x128xf32>
    %29 = arith.subf %28, %27 : vector<8x128xf32>
    %30 = math.sqrt %29 : vector<8x128xf32>
    %31 = arith.mulf %29, %30 : vector<8x128xf32>
    %32 = arith.mulf %11, %31 : vector<8x128xf32>
    %cst_11 = arith.constant 2.500000e-01 : f32
    %33 = vector.broadcast %cst_11 : f32 to vector<8x128xf32>
    %34 = arith.mulf %1, %33 : vector<8x128xf32>
    %cst_12 = arith.constant 1.000000e+00 : f32
    %35 = vector.broadcast %cst_12 : f32 to vector<8x128xf32>
    %36 = arith.subf %35, %1 : vector<8x128xf32>
    %cst_13 = arith.constant 7.500000e-01 : f32
    %37 = vector.broadcast %cst_13 : f32 to vector<8x128xf32>
    %38 = arith.mulf %36, %37 : vector<8x128xf32>
    %39 = arith.addf %34, %38 : vector<8x128xf32>
    %40 = arith.mulf %32, %39 : vector<8x128xf32>
    %41 = vector.shape_cast %40 : vector<8x128xf32> to vector<1x8x128xf32>
    %cst_14 = arith.constant dense<0.000000e+00> : vector<8x128xf32>
    %42 = vector.multi_reduction <add>, %41, %cst_14 [0] : vector<1x8x128xf32> to vector<8x128xf32>
    %c0_15 = arith.constant 0 : index
    %c0_16 = arith.constant 0 : index
    %43 = vector.load %arg3[%c0_15, %c0_16] : memref<8x128xf32, #tpu.memory_space<vmem>>, vector<8x128xf32>
    tpu.vector_store %arg3[%c0_15, %c0_16], %42 {strides = array<i32>} : memref<8x128xf32, #tpu.memory_space<vmem>>, vector<8x128xf32>,
    return
  }
  func.func @transform_0(%arg0: i32) -> (i32, i32) {
    %c0_i32 = arith.constant 0 : i32
    %c0_i32_0 = arith.constant 0 : i32
    return %arg0, %c0_i32 : i32, i32
  }
  func.func @transform_1(%arg0: i32) -> (i32, i32) {
    %c0_i32 = arith.constant 0 : i32
    %c0_i32_0 = arith.constant 0 : i32
    return %arg0, %c0_i32 : i32, i32
  }
  func.func @transform_2(%arg0: i32) -> (i32, i32) {
    %c0_i32 = arith.constant 0 : i32
    %c0_i32_0 = arith.constant 0 : i32
    return %arg0, %c0_i32 : i32, i32
  }
}

</mosaic_0001>

<llo_original>
// kernel: tpu_custom_call.1
$region0: #{tpu_custom_call.1}
  #allocation0 [shape = 'u32[]', space=smem, size = 0x4, offset = 0x4, fixed_abs, tag = 'smem constant byte address 0x4 - core index']
  #allocation1 [shape = 'u32[72,128]{1,0:T(1,128)}', space=vmem, size = 0x9000, scoped, tag = 'internal scratch']
  %s0 = inlined_call_operand.hbm [shape: f32[16,128], index: 0, kind: input, shape index: {}]
  %s1 = inlined_call_operand.hbm [shape: f32[16,128], index: 1, kind: input, shape index: {}]
  %s2 = inlined_call_operand.hbm [shape: f32[16,128], index: 2, kind: output, shape index: {}]
  %s3 = sld [smem:[#allocation0]]
  $region49: #{tpu_custom_call.1} parent=0
    _
  %s5 = ssub.s32 1, %s3
  %s6 = scalar_select 0, %s5, %s3
  $region1: #{tpu_custom_call.1} parent=0
    #allocation2 [shape = 'u8[8192]{0}', space=vmem, size = 0x2000, scoped, tag = 'input window, operand 0']
    #allocation3 [shape = 's32[2]{0}', space=sflag, size = 0x8, scoped, tag = 'scoped memory for tpu_custom_call.1']
    #allocation4 [shape = 's32[2]{0}', space=sflag, size = 0x8, scoped, tag = 'scoped memory for tpu_custom_call.1']
    #allocation5 [shape = 'u8[8192]{0}', space=vmem, size = 0x2000, scoped, tag = 'input window, operand 1']
    #allocation6 [shape = 's32[2]{0}', space=sflag, size = 0x8, scoped, tag = 'scoped memory for tpu_custom_call.1']
    #allocation7 [shape = 'u8[8192]{0}', space=vmem, size = 0x2000, scoped, tag = 'output window, operand 0']
    %7 = vsyncpa [#allocation3], 0
    %s8 = scalar_lea.sflag [#allocation3], 1
    %9 = vsyncpa %s8, 0
    %10 = vsyncpa [#allocation6], 0
    %s11 = scalar_lea.sflag [#allocation6], 1
    %12 = vsyncpa %s11, 0
    %13 = vsyncpa [#allocation4], 0
    %s14 = scalar_lea.sflag [#allocation4], 1
    %15 = vsyncpa %s14, 0
    loop: start=0, step=1, limit=4
    $region2: #{tpu_custom_call.1} parent=1 // loop_pre_header
      _
    $region3: #{tpu_custom_call.1} parent=1 // loop_header
      %s17 = sphi 0, %s21
      %p18 = scmp.ge.s32.totalorder %s17, 4
      %s27 = sphi 0, %s29
      %s30 = sphi 0, %s27
      %s31 = sphi 0, %s30
      %s47 = sphi 0, %s31
      %s53 = sphi 0, %s55
      %s56 = sphi 0, %s53
      %s57 = sphi 0, %s56
      %s73 = sphi 0, %s57
      %s79 = sphi 0, %s81
      %s82 = sphi 0, %s79
      %s83 = sphi 0, %s82
      %s99 = sphi 0, %s83
    $region4: #{tpu_custom_call.1} parent=1 // loop_header_branch
      %20 = sbr.rel (%p18) target = $region8
    $region5: #{tpu_custom_call.1} parent=1 // loop_body
      %s22 = ssub.s32 %s17, 1
      %s23 = ssub.s32 %s17, 2
      %s24 = sadd.s32 %s17, 1
      %s25 = ssub.s32 %s17, %s24
      %p26 = scmp.eq.s32.totalorder %s25, 0
      %s28 = sadd.s32 %s27, 1
      %s29 = scalar_select %p26, %s27, %s28
      %p32 = pneg %p26
      %p33 = scmp.eq.s32.totalorder %s17, 1
      %p34 = por %p32, %p33
      %p35 = scmp.ne.s32.totalorder %s27, %s30
      %p36 = scmp.eq.s32.totalorder %s17, 0
      %p37 = por %p35, %p36
      %p38 = scmp.ne.s32.totalorder %s27, %s30
      %p39 = scmp.eq.s32.totalorder %s22, 1
      %p40 = por %p38, %p39
      %p41 = scmp.ne.s32.totalorder %s30, %s31
      %p42 = scmp.eq.s32.totalorder %s22, 0
      %p43 = por %p41, %p42
      %p44 = scmp.ne.s32.totalorder %s30, %s31
      %p45 = scmp.eq.s32.totalorder %s23, 1
      %p46 = por %p44, %p45
      %p48 = scmp.ne.s32.totalorder %s31, %s47
      %p49 = scmp.eq.s32.totalorder %s23, 0
      %p50 = por %p48, %p49
      %s51 = ssub.s32 %s17, %s24
      %p52 = scmp.eq.s32.totalorder %s51, 0
      %s54 = sadd.s32 %s53, 1
      %s55 = scalar_select %p52, %s53, %s54
      %p58 = pneg %p52
      %p59 = scmp.eq.s32.totalorder %s17, 1
      %p60 = por %p58, %p59
      %p61 = scmp.ne.s32.totalorder %s53, %s56
      %p62 = scmp.eq.s32.totalorder %s17, 0
      %p63 = por %p61, %p62
      %p64 = scmp.ne.s32.totalorder %s53, %s56
      %p65 = scmp.eq.s32.totalorder %s22, 1
      %p66 = por %p64, %p65
      %p67 = scmp.ne.s32.totalorder %s56, %s57
      %p68 = scmp.eq.s32.totalorder %s22, 0
      %p69 = por %p67, %p68
      %p70 = scmp.ne.s32.totalorder %s56, %s57
      %p71 = scmp.eq.s32.totalorder %s23, 1
      %p72 = por %p70, %p71
      %p74 = scmp.ne.s32.totalorder %s57, %s73
      %p75 = scmp.eq.s32.totalorder %s23, 0
      %p76 = por %p74, %p75
      %s77 = ssub.s32 %s17, %s24
      %p78 = scmp.eq.s32.totalorder %s77, 0
      %s80 = sadd.s32 %s79, 1
      %s81 = scalar_select %p78, %s79, %s80
      %p84 = pneg %p78
      %p85 = scmp.eq.s32.totalorder %s17, 1
      %p86 = por %p84, %p85
      %p87 = scmp.ne.s32.totalorder %s79, %s82
      %p88 = scmp.eq.s32.totalorder %s17, 0
      %p89 = por %p87, %p88
      %p90 = scmp.ne.s32.totalorder %s79, %s82
      %p91 = scmp.eq.s32.totalorder %s22, 1
      %p92 = por %p90, %p91
      %p93 = scmp.ne.s32.totalorder %s82, %s83
      %p94 = scmp.eq.s32.totalorder %s22, 0
      %p95 = por %p93, %p94
      %p96 = scmp.ne.s32.totalorder %s82, %s83
      %p97 = scmp.eq.s32.totalorder %s23, 1
      %p98 = por %p96, %p97
      %p100 = scmp.ne.s32.totalorder %s83, %s99
      %p101 = scmp.eq.s32.totalorder %s23, 0
      %p102 = por %p100, %p101
      %p103 = scmp.le.s32.totalorder 1, %s17
      %p104 = scmp.lt.s32.totalorder %s17, 3
      %p105 = pnand %p103, %p104
      %p106 = pneg %p105
      // Predicated region
      $region9: #{tpu_custom_call.1} parent=5 // pred_check
        _
      $region10: #{tpu_custom_call.1} parent=5 // pred_check_branch
        %108 = sbr.rel (%p105) target = $region12
      $region11: #{tpu_custom_call.1} parent=5 // pred_region
        %s109 = ssub.s32 %s17, 1
      $region12: #{tpu_custom_call.1} parent=5 // pred_fallthru
        _
      %p110 = scmp.lt.s32.totalorder %s17, 2
      // Predicated region
      $region13: #{tpu_custom_call.1} parent=5 // pred_check
        %p111 = pneg %p110
      $region14: #{tpu_custom_call.1} parent=5 // pred_check_branch
        %113 = sbr.rel (%p111) target = $region16
      $region15: #{tpu_custom_call.1} parent=5 // pred_region
        // Predicated region
        $region17: #{tpu_custom_call.1} parent=15 // pred_check
          %p114 = pneg %p37
        $region18: #{tpu_custom_call.1} parent=15 // pred_check_branch
          %116 = sbr.rel (%p114) target = $region20
        $region19: #{tpu_custom_call.1} parent=15 // pred_region
          %s117 = sand.u32 %s27, 1
          %s118 = scalar_lea.sflag [#allocation3], %s117
          %s119 = sand.u32 %s27, 1
          %s120 = smul.addr %s119, 8
          %s121 = scalar_lea.vmem [#allocation2], %s120
          %123 = vsyncadd %s118, 0
          %s124 = smul.addr %s17, 8
          %s125 = scalar_lea.hbm %s0, %s124
          %s127 = sshll.u32 %s125, 4
          %s128 = int_to_ptr.hbm [resolvable:$true] %s127
          %s129 = sshll.u32 %s121, 4
          %s130 = int_to_ptr.vmem [resolvable:$true] %s129
          %132 = dma.hbm_to_vmem [thread:$0]  %s128, 128, %s130, %s118
        $region20: #{tpu_custom_call.1} parent=15 // pred_fallthru
          _
        // Predicated region
        $region21: #{tpu_custom_call.1} parent=15 // pred_check
          %p133 = pneg %p63
        $region22: #{tpu_custom_call.1} parent=15 // pred_check_branch
          %135 = sbr.rel (%p133) target = $region24
        $region23: #{tpu_custom_call.1} parent=15 // pred_region
          %s136 = sand.u32 %s53, 1
          %s137 = scalar_lea.sflag [#allocation6], %s136
          %s138 = sand.u32 %s53, 1
          %s139 = smul.addr %s138, 8
          %s140 = scalar_lea.vmem [#allocation5], %s139
          %142 = vsyncadd %s137, 0
          %s143 = smul.addr %s17, 8
          %s144 = scalar_lea.hbm %s1, %s143
          %s146 = sshll.u32 %s144, 4
          %s147 = int_to_ptr.hbm [resolvable:$true] %s146
          %s148 = sshll.u32 %s140, 4
          %s149 = int_to_ptr.vmem [resolvable:$true] %s148
          %151 = dma.hbm_to_vmem [thread:$0]  %s147, 128, %s149, %s137
        $region24: #{tpu_custom_call.1} parent=15 // pred_fallthru
          _
      $region16: #{tpu_custom_call.1} parent=5 // pred_fallthru
        _
      %p152 = scmp.le.s32.totalorder 1, %s17
      %p153 = scmp.lt.s32.totalorder %s17, 3
      %p154 = pnand %p152, %p153
      %p155 = pneg %p154
      // Predicated region
      $region25: #{tpu_custom_call.1} parent=5 // pred_check
        _
      $region26: #{tpu_custom_call.1} parent=5 // pred_check_branch
        %157 = sbr.rel (%p154) target = $region28
      $region27: #{tpu_custom_call.1} parent=5 // pred_region
        %s158 = ssub.s32 %s17, 1
        %s159 = sand.u32 %s30, 1
        %s160 = scalar_lea.sflag [#allocation3], %s159
        %s161 = sand.u32 %s30, 1
        %s162 = smul.addr %s161, 8
        %s163 = scalar_lea.vmem [#allocation2], %s162
        // Predicated region
        $region29: #{tpu_custom_call.1} parent=27 // pred_check
          %p164 = pneg %p43
        $region30: #{tpu_custom_call.1} parent=27 // pred_check_branch
          %166 = sbr.rel (%p164) target = $region32
        $region31: #{tpu_custom_call.1} parent=27 // pred_region
          %168 = dma.done %s160, 128
        $region32: #{tpu_custom_call.1} parent=27 // pred_fallthru
          _
        %s169 = sand.u32 %s56, 1
        %s170 = scalar_lea.sflag [#allocation6], %s169
        %s171 = sand.u32 %s56, 1
        %s172 = smul.addr %s171, 8
        %s173 = scalar_lea.vmem [#allocation5], %s172
        // Predicated region
        $region33: #{tpu_custom_call.1} parent=27 // pred_check
          %p174 = pneg %p69
        $region34: #{tpu_custom_call.1} parent=27 // pred_check_branch
          %176 = sbr.rel (%p174) target = $region36
        $region35: #{tpu_custom_call.1} parent=27 // pred_region
          %178 = dma.done %s170, 128
        $region36: #{tpu_custom_call.1} parent=27 // pred_fallthru
          _
        %s179 = sand.u32 %s30, 1
        %s180 = scalar_lea.sflag [#allocation3], %s179
        %s181 = sand.u32 %s30, 1
        %s182 = smul.addr %s181, 8
        %s183 = scalar_lea.vmem [#allocation2], %s182
        %p184 = pneg %p43
        %p185 = pneg %p40
        %s186 = sand.u32 %s56, 1
        %s187 = scalar_lea.sflag [#allocation6], %s186
        %s188 = sand.u32 %s56, 1
        %s189 = smul.addr %s188, 8
        %s190 = scalar_lea.vmem [#allocation5], %s189
        %p191 = pneg %p69
        %p192 = pneg %p66
        %p193 = pneg %p95
        %p194 = pneg %p92
        %s195 = sand.u32 %s82, 1
        %s196 = scalar_lea.sflag [#allocation4], %s195
        %s197 = sand.u32 %s82, 1
        %s198 = smul.addr %s197, 8
        %s199 = scalar_lea.vmem [#allocation7], %s198
        %v200 = vld [vmem:[%s163] sm:$0xff]
        %v201 = vld [vmem:[%s173] sm:$0xff]
        %v202 = vand.u32 2147483647, %v200
        %v203 = vsub.f32 0.0, %v202
        %v204 = vmul.f32 %v203, 1.442695
        %v205 = vpow.pop %v204
        %v206 = vmax.f32 %v200, 0.0
        %v207 = vmul.f32 %v200, %v201
        %v208 = vsub.f32 %v206, %v207
        %v209 = vadd.f32 %v205, 1.0
        %v210 = vlog2.pop %v209
        %v211 = vmul.f32 %v210, 0.6931472
        %v212 = vmul.f32 -0.5, %v205
        %v213 = vadd.f32 %v212, 1.0
        %v214 = vmul.f32 %v213, %v205
        %v215 = vand.u32 2147483647, %v205
        %vm216 = vcmp.lt.f32.partialorder %v215, 0.0004427343
        %v217 = vsel %vm216, %v214, %v211
        %v218 = vadd.f32 %v208, %v217
        %v219 = vadd.f32 %v205, 1.0
        %v220 = vrcp.pop %v219
        %v221 = vmul.f32 %v219, %v220
        %v222 = vsub.f32 1.0, %v221
        %v223 = vmul.f32 %v220, %v222
        %v224 = vadd.f32 %v220, %v223
        %vm225 = vweird.f32 %v219
        %vm226 = vweird.f32 %v220
        %vm227 = vmor %vm225, %vm226
        %v228 = vsel %vm227, %v220, %v224
        %v229 = vand.u32 2147483647, %v219
        %vm230 = vcmp.eq.f32.partialorder %v229, 8.507059e+37
        %v231 = vand.u32 %v219, 2147483648
        %v232 = vor.u32 1.1754944e-38, %v231
        %v233 = vsel %vm230, %v232, %v228
        %v234 = vmul.f32 1.0, %v233
        %vm235 = vcmp.ge.f32.partialorder %v200, 0.0
        %v236 = vsub.f32 1.0, %v234
        %v237 = vsel %vm235, %v234, %v236
        %v238 = vmul.f32 %v201, %v237
        %v239 = vsub.f32 1.0, %v201
        %v240 = vsub.f32 1.0, %v237
        %v241 = vmul.f32 %v239, %v240
        %v242 = vadd.f32 %v238, %v241
        %v243 = vsub.f32 1.0, %v242
        %v244 = vrsqrt.pop %v243
        %v245 = vmul.f32 %v244, %v243
        %v246 = vmul.f32 %v245, %v244
        %v247 = vmul.f32 0.5, %v246
        %v248 = vsub.f32 1.5, %v247
        %v249 = vmul.f32 %v244, %v248
        %v250 = vmul.f32 %v243, %v249
        %vm251 = vcmp.eq.f32.partialorder %v243, inf
        %v252 = vsel %vm251, %v243, %v250
        %vm253 = vcmp.eq.f32.partialorder %v243, 0.0
        %v254 = vand.u32 %v243, 2147483648
        %v255 = vsel %vm253, %v254, %v252
        %v256 = vmul.f32 %v243, %v255
        %v257 = vmul.f32 %v218, %v256
        %v258 = vmul.f32 %v201, 0.25
        %v259 = vmul.f32 %v239, 0.75
        %v260 = vadd.f32 %v258, %v259
        %v261 = vmul.f32 %v257, %v260
        %v262 = vadd.f32 %v261, 0.0
        %263 = vst [vmem:[%s199] sm:$0xff] %v262
        %s264 = sand.u32 %s82, 1
        %s265 = scalar_lea.sflag [#allocation4], %s264
        %s266 = sand.u32 %s82, 1
        %s267 = smul.addr %s266, 8
        %s268 = scalar_lea.vmem [#allocation7], %s267
        // Predicated region
        $region37: #{tpu_custom_call.1} parent=27 // pred_check
          %p269 = pneg %p92
        $region38: #{tpu_custom_call.1} parent=27 // pred_check_branch
          %271 = sbr.rel (%p269) target = $region40
        $region39: #{tpu_custom_call.1} parent=27 // pred_region
          %273 = vsyncadd %s265, 0
          %s274 = smul.addr %s22, 8
          %s275 = scalar_lea.hbm %s2, %s274
          %s277 = sshll.u32 %s268, 4
          %s278 = int_to_ptr.vmem [resolvable:$true] %s277
          %s279 = sshll.u32 %s275, 4
          %s280 = int_to_ptr.hbm [resolvable:$true] %s279
          %282 = dma.vmem_to_hbm [thread:$0]  %s278, 128, %s280, %s265
        $region40: #{tpu_custom_call.1} parent=27 // pred_fallthru
          _
      $region28: #{tpu_custom_call.1} parent=5 // pred_fallthru
        _
      %p283 = scmp.le.s32.totalorder 2, %s17
      // Predicated region
      $region41: #{tpu_custom_call.1} parent=5 // pred_check
        %p284 = pneg %p283
      $region42: #{tpu_custom_call.1} parent=5 // pred_check_branch
        %286 = sbr.rel (%p284) target = $region44
      $region43: #{tpu_custom_call.1} parent=5 // pred_region
        %s287 = ssub.s32 %s17, 2
        // Predicated region
        $region45: #{tpu_custom_call.1} parent=43 // pred_check
          %p288 = pneg %p98
        $region46: #{tpu_custom_call.1} parent=43 // pred_check_branch
          %290 = sbr.rel (%p288) target = $region48
        $region47: #{tpu_custom_call.1} parent=43 // pred_region
          %s291 = sand.u32 %s83, 1
          %s292 = scalar_lea.sflag [#allocation4], %s291
          %s293 = sand.u32 %s83, 1
          %s294 = smul.addr %s293, 8
          %s295 = scalar_lea.vmem [#allocation7], %s294
          %297 = dma.done %s292, 128
        $region48: #{tpu_custom_call.1} parent=43 // pred_fallthru
          _
      $region44: #{tpu_custom_call.1} parent=5 // pred_fallthru
        _
    $region6: #{tpu_custom_call.1} parent=1 // loop_footer
      %s21 = sadd.s32 1, %s17
    $region7: #{tpu_custom_call.1} parent=1 // loop_footer_branch
      %16 = sbr.rel target = $region3
    $region8: #{tpu_custom_call.1} parent=1 // loop_exit
      _
    %298 = vsyncpa [#allocation3], 1
    %s299 = scalar_lea.sflag [#allocation3], 1
    %300 = vsyncpa %s299, 1
    %301 = vsyncpa [#allocation6], 1
    %s302 = scalar_lea.sflag [#allocation6], 1
    %303 = vsyncpa %s302, 1
    %304 = vsyncpa [#allocation4], 1
    %s305 = scalar_lea.sflag [#allocation4], 1
    %306 = vsyncpa %s305, 1

</llo_original>
